<compile_context>
chip_gen: v7x
topology: tpu7x:2x2x1
jax: 0.10.0
libtpu: 0.0.40
codegen_flags: <defaults>
</compile_context>

<pallas_src>
import functools

import jax
import jax.numpy as jnp
from jax.experimental import pallas as pl
from jax.experimental.pallas import tpu as pltpu

LANE = 128  # vreg lane width (last dim); also used for node-row rounding


def _round_up(x, m):
    return (x + m - 1) // m * m


def _chip_aware_vmem_limit():
    """VMEM limit with headroom; caps correctly on v7x's 64 MiB physical VMEM."""
    try:
        info = pltpu.get_tpu_info()
        cap = int(getattr(info, "vmem_capacity_bytes", 64 * 1024 * 1024))
    except Exception:
        cap = 64 * 1024 * 1024  # conservative (v7x-sized) fallback
    return int(min(cap - (8 << 20), 100 << 20))


# ----------------------------------------------------------------------------
# Fused Pallas kernel: MLP (all linear layers) + k-step APPNP propagation.
# ----------------------------------------------------------------------------
def _fused_appnp_kernel(a_ref, x_ref, *refs, alpha: float, k: int, n_layers: int):
    # a_ref : [Np, Np]            bf16, already scaled by (1 - alpha)
    # x_ref : [Np, P0]            bf16 lane-padded node features
    # refs  : (w0, b0, ..., w_{L-1}, b_{L-1}, o_ref)
    #   w_l : [P_l, P_{l+1}]      bf16 lane-padded weight
    #   b_l : [1, P_{l+1}]        f32 lane-padded bias
    #   o   : [Np, P_L]           f32 lane-dense output slab
    o_ref = refs[-1]

    # ---- MLP: statically unrolled over layers, ReLU on all but the last ----
    h = x_ref[...]                                            # bf16
    for li in range(n_layers):
        w_ref = refs[2 * li]
        b_ref = refs[2 * li + 1]
        y = jnp.dot(h.astype(jnp.bfloat16), w_ref[...],
                    preferred_element_type=jnp.float32)        # MXU, f32 accum
        y = y + b_ref[...]                                     # f32 bias add
        if li < n_layers - 1:
            y = jnp.maximum(y, 0.0)                            # f32 ReLU
        h = y                                                  # f32

    # ---- APPNP propagation: h_{t+1} = A_scaled @ h_t + alpha * h_0 ---------
    a = a_ref[...]                 # bf16, resident across all k steps
    ah0 = alpha * h                # hoisted: computed once, f32
    out = h                        # f32 running result
    h_bf = h.astype(jnp.bfloat16)  # bf16 operand for the MXU
    for _ in range(k):             # k small & static -> fully unrolled
        prop = jnp.dot(a, h_bf, preferred_element_type=jnp.float32)
        out = prop + ah0                                       # single VPU add
        h_bf = out.astype(jnp.bfloat16)

    o_ref[...] = out.astype(o_ref.dtype)


# ----------------------------------------------------------------------------
# Wrapper: per-layer lane padding, single (grid-less) pallas_call, slice out.
# ----------------------------------------------------------------------------
def appnp_forward(a_hat, features, params, *, alpha, k, mm_dtype=jnp.bfloat16):
    N, in_feats = features.shape
    n_layers = len(params)
    n_classes = params[-1][0].shape[1]

    dims = [in_feats] + [w.shape[1] for (w, _) in params]
    pdims = [_round_up(d, LANE) for d in dims]     # per-layer lane-padded widths
    Np = _round_up(N, LANE)                        # lane-dense node dimension

    # bf16 MXU operands built in the wrapper; zero padding keeps math exact.
    x_p = (jnp.zeros((Np, pdims[0]), mm_dtype)
           .at[:N, :in_feats].set(features.astype(mm_dtype)))
    a_scaled = (1.0 - alpha) * a_hat               # fold (1-alpha) into A once
    a_p = (jnp.zeros((Np, Np), mm_dtype)
           .at[:N, :N].set(a_scaled.astype(mm_dtype)))

    layer_args = []
    vmem_spec = pl.BlockSpec(memory_space=pltpu.MemorySpace.VMEM)
    in_specs = [vmem_spec, vmem_spec]
    for li, (w, b) in enumerate(params):
        fin, fout = w.shape
        w_p = (jnp.zeros((pdims[li], pdims[li + 1]), mm_dtype)
               .at[:fin, :fout].set(w.astype(mm_dtype)))
        b_p = jnp.zeros((1, pdims[li + 1]), jnp.float32).at[:, :fout].set(b)
        layer_args += [w_p, b_p]
        in_specs += [vmem_spec, vmem_spec]

    out = pl.pallas_call(
        functools.partial(_fused_appnp_kernel, alpha=float(alpha), k=int(k),
                          n_layers=n_layers),
        out_shape=jax.ShapeDtypeStruct((Np, pdims[-1]), jnp.float32),
        in_specs=in_specs,
        out_specs=vmem_spec,
        compiler_params=pltpu.CompilerParams(
            vmem_limit_bytes=_chip_aware_vmem_limit()),
    )(a_p, x_p, *layer_args)

    return out[:N, :n_classes]


# ----------------------------------------------------------------------------
# Model glue (plain JAX)
# ----------------------------------------------------------------------------
def init_params(key, in_feats, hiddens, n_classes):
    dims = [in_feats] + list(hiddens) + [n_classes]
    params = []
    for i in range(len(dims) - 1):
        fin, fout = dims[i], dims[i + 1]
        key, kw, kb = jax.random.split(key, 3)
        bound = 1.0 / jnp.sqrt(jnp.float32(fin))
        # weights stored as [Fin, Fout] so the kernel does x @ W directly.
        w = jax.random.uniform(kw, (fin, fout), jnp.float32, -bound, bound)
        b = jax.random.uniform(kb, (1, fout), jnp.float32, -bound, bound)
        params.append((w, b))
    return params


def normalized_adjacency(adj):
    # symmetric D^{-1/2} A D^{-1/2}, degrees clamped at 1 (as DGL does)
    deg = jnp.maximum(jnp.sum(adj, axis=1), 1.0)
    norm = jax.lax.rsqrt(deg)
    return norm[:, None] * adj * norm[None, :]


# ----------------------------------------------------------------------------
if __name__ == "__main__":
    key = jax.random.PRNGKey(0)

    N = 128          # number of graph nodes
    in_feats = 32
    hiddens = [64]
    n_classes = 16
    alpha = 0.1
    k = 3
    mm_dtype = jnp.bfloat16   # MXU operand dtype (f32 accumulation everywhere)

    key, k_feat, k_adj, k_param = jax.random.split(key, 4)
    features = jax.random.normal(k_feat, (N, in_feats), jnp.float32)

    # deterministic random undirected graph (dense adjacency, ~5% density)
    rand = jax.random.uniform(k_adj, (N, N))
    adj = (rand < 0.05).astype(jnp.float32)
    adj = jnp.maximum(adj, adj.T)                       # symmetrize
    adj = adj * (1.0 - jnp.eye(N, dtype=jnp.float32))   # no self loops
    a_hat = normalized_adjacency(adj)

    params = init_params(k_param, in_feats, hiddens, n_classes)

    out = appnp_forward(a_hat, features, params, alpha=alpha, k=k,
                        mm_dtype=mm_dtype)
    out = jax.block_until_ready(out)
    assert out.shape == (N, n_classes)

    # ---- Reference 1: same numerics as the kernel (bf16 operands, f32 acc,
    #      (1-alpha) pre-folded into A, h kept bf16 between steps). ----------
    def ref_forward_same():
        h = features.astype(mm_dtype)
        L = len(params)
        for li, (w, b) in enumerate(params):
            y = jnp.dot(h.astype(mm_dtype), w.astype(mm_dtype),
                        preferred_element_type=jnp.float32) + b
            h = jnp.maximum(y, 0.0) if li < L - 1 else y
        a = ((1.0 - alpha) * a_hat).astype(mm_dtype)
        ah0 = alpha * h
        hb = h.astype(mm_dtype)
        res = h
        for _ in range(k):
            res = jnp.dot(a, hb, preferred_element_type=jnp.float32) + ah0
            hb = res.astype(mm_dtype)
        return res

    ref_same = ref_forward_same()
    assert jnp.allclose(out, ref_same, atol=2e-3, rtol=2e-3), \
        float(jnp.max(jnp.abs(out - ref_same)))

    # ---- Reference 2: full-f32 semantics of the original PyTorch module. ---
    def ref_forward_f32():
        h = features
        L = len(params)
        for li, (w, b) in enumerate(params):
            y = jnp.dot(h, w, preferred_element_type=jnp.float32) + b
            h = jnp.maximum(y, 0.0) if li < L - 1 else y
        h0 = h
        for _ in range(k):
            h = (1.0 - alpha) * jnp.dot(a_hat, h,
                                        preferred_element_type=jnp.float32) \
                + alpha * h0
        return h

    ref_f32 = ref_forward_f32()
    assert jnp.allclose(out, ref_f32, atol=5e-2, rtol=5e-2), \
        float(jnp.max(jnp.abs(out - ref_f32)))

    print("KERNEL_OK")
    # TODO(synk): edge_drop (per-edge dropout during training) skipped; eval mode.
</pallas_src>

<mosaic_0001>
module attributes {stable_mosaic.version = 11 : i64} {
  func.func @_fused_appnp_kernel(%arg0: memref<128x128xbf16, #tpu.memory_space<vmem>>, %arg1: memref<128x128xbf16, #tpu.memory_space<vmem>>, %arg2: memref<128x128xbf16, #tpu.memory_space<vmem>>, %arg3: memref<1x128xf32, #tpu.memory_space<vmem>>, %arg4: memref<128x128xbf16, #tpu.memory_space<vmem>>, %arg5: memref<1x128xf32, #tpu.memory_space<vmem>>, %arg6: memref<128x128xf32, #tpu.memory_space<vmem>>) attributes {dimension_semantics = [], scalar_prefetch = 0 : i64, scratch_operands = 0 : i64, tpu.core_type = #tpu.core_type<tc>} {
    %c0 = arith.constant 0 : index
    %c0_0 = arith.constant 0 : index
    %0 = vector.load %arg1[%c0, %c0_0] : memref<128x128xbf16, #tpu.memory_space<vmem>>, vector<128x128xbf16>
    %c0_1 = arith.constant 0 : index
    %c0_2 = arith.constant 0 : index
    %1 = vector.load %arg2[%c0_1, %c0_2] : memref<128x128xbf16, #tpu.memory_space<vmem>>, vector<128x128xbf16>
    %cst = arith.constant dense<0.000000e+00> : vector<128x128xf32>
    %2 = tpu.matmul %0, %1, %cst {dimension_numbers = #tpu.dot_dimension_numbers<[1], [0], [0], [1], [0, 0, 1, 1], [], []>} : vector<128x128xbf16>, vector<128x128xbf16>, vector<128x128xf32> -> vector<128x128xf32>
    %c0_3 = arith.constant 0 : index
    %c0_4 = arith.constant 0 : index
    %3 = vector.load %arg3[%c0_3, %c0_4] : memref<1x128xf32, #tpu.memory_space<vmem>>, vector<1x128xf32>
    %4 = vector.broadcast %3 : vector<1x128xf32> to vector<128x128xf32>
    %5 = arith.addf %2, %4 : vector<128x128xf32>
    %cst_5 = arith.constant 0.000000e+00 : f32
    %6 = vector.broadcast %cst_5 : f32 to vector<128x128xf32>
    %7 = arith.maximumf %5, %6 : vector<128x128xf32>
    %8 = arith.truncf %7 : vector<128x128xf32> to vector<128x128xbf16>
    %c0_6 = arith.constant 0 : index
    %c0_7 = arith.constant 0 : index
    %9 = vector.load %arg4[%c0_6, %c0_7] : memref<128x128xbf16, #tpu.memory_space<vmem>>, vector<128x128xbf16>
    %cst_8 = arith.constant dense<0.000000e+00> : vector<128x128xf32>
    %10 = tpu.matmul %8, %9, %cst_8 {dimension_numbers = #tpu.dot_dimension_numbers<[1], [0], [0], [1], [0, 0, 1, 1], [], []>} : vector<128x128xbf16>, vector<128x128xbf16>, vector<128x128xf32> -> vector<128x128xf32>
    %c0_9 = arith.constant 0 : index
    %c0_10 = arith.constant 0 : index
    %11 = vector.load %arg5[%c0_9, %c0_10] : memref<1x128xf32, #tpu.memory_space<vmem>>, vector<1x128xf32>
    %12 = vector.broadcast %11 : vector<1x128xf32> to vector<128x128xf32>
    %13 = arith.addf %10, %12 : vector<128x128xf32>
    %c0_11 = arith.constant 0 : index
    %c0_12 = arith.constant 0 : index
    %14 = vector.load %arg0[%c0_11, %c0_12] : memref<128x128xbf16, #tpu.memory_space<vmem>>, vector<128x128xbf16>
    %cst_13 = arith.constant 1.000000e-01 : f32
    %15 = vector.broadcast %cst_13 : f32 to vector<128x128xf32>
    %16 = arith.mulf %15, %13 : vector<128x128xf32>
    %17 = arith.truncf %13 : vector<128x128xf32> to vector<128x128xbf16>
    %cst_14 = arith.constant dense<0.000000e+00> : vector<128x128xf32>
    %18 = tpu.matmul %14, %17, %cst_14 {dimension_numbers = #tpu.dot_dimension_numbers<[1], [0], [0], [1], [0, 0, 1, 1], [], []>} : vector<128x128xbf16>, vector<128x128xbf16>, vector<128x128xf32> -> vector<128x128xf32>
    %19 = arith.addf %18, %16 : vector<128x128xf32>
    %20 = arith.truncf %19 : vector<128x128xf32> to vector<128x128xbf16>
    %cst_15 = arith.constant dense<0.000000e+00> : vector<128x128xf32>
    %21 = tpu.matmul %14, %20, %cst_15 {dimension_numbers = #tpu.dot_dimension_numbers<[1], [0], [0], [1], [0, 0, 1, 1], [], []>} : vector<128x128xbf16>, vector<128x128xbf16>, vector<128x128xf32> -> vector<128x128xf32>
    %22 = arith.addf %21, %16 : vector<128x128xf32>
    %23 = arith.truncf %22 : vector<128x128xf32> to vector<128x128xbf16>
    %cst_16 = arith.constant dense<0.000000e+00> : vector<128x128xf32>
    %24 = tpu.matmul %14, %23, %cst_16 {dimension_numbers = #tpu.dot_dimension_numbers<[1], [0], [0], [1], [0, 0, 1, 1], [], []>} : vector<128x128xbf16>, vector<128x128xbf16>, vector<128x128xf32> -> vector<128x128xf32>
    %25 = arith.addf %24, %16 : vector<128x128xf32>
    %c0_17 = arith.constant 0 : index
    %c0_18 = arith.constant 0 : index
    %26 = vector.load %arg6[%c0_17, %c0_18] : memref<128x128xf32, #tpu.memory_space<vmem>>, vector<128x128xf32>
    tpu.vector_store %arg6[%c0_17, %c0_18], %25 {strides = array<i32>} : memref<128x128xf32, #tpu.memory_space<vmem>>, vector<128x128xf32>,
    return
  }
}

</mosaic_0001>

<llo_original>
// kernel: tpu_custom_call.1
$region0: #{tpu_custom_call.1}
  #allocation0 [shape = 'u32[]', space=smem, size = 0x4, offset = 0x4, fixed_abs, tag = 'smem constant byte address 0x4 - core index']
  #allocation1 [shape = 'u32[144,128]{1,0:T(1,128)}', space=vmem, size = 0x12000, scoped, tag = 'internal scratch']
  %s0 = inlined_call_operand.hbm [shape: bf16[128,128], index: 0, kind: input, shape index: {}]
  %s1 = inlined_call_operand.hbm [shape: bf16[128,128], index: 1, kind: input, shape index: {}]
  %s2 = inlined_call_operand.hbm [shape: bf16[128,128], index: 2, kind: input, shape index: {}]
  %s3 = inlined_call_operand.vmem [shape: f32[1,128], index: 3, kind: input, shape index: {}]
  %s4 = inlined_call_operand.hbm [shape: bf16[128,128], index: 4, kind: input, shape index: {}]
  %s5 = inlined_call_operand.vmem [shape: f32[1,128], index: 5, kind: input, shape index: {}]
  %s6 = inlined_call_operand.hbm [shape: f32[128,128], index: 6, kind: output, shape index: {}]
  %s7 = sld [smem:[#allocation0]]
  $region50: #{tpu_custom_call.1} parent=0
    _
  %s9 = ssub.s32 1, %s7
  %s10 = scalar_select 0, %s9, %s7
  $region1: #{tpu_custom_call.1} parent=0
    #allocation2 [shape = 'u8[32768]{0}', space=vmem, size = 0x8000, scoped, tag = 'input window, operand 0, single buffered']
    #allocation3 [shape = 's32[1]{0}', space=sflag, size = 0x4, scoped, tag = 'scoped memory for tpu_custom_call.1']
    #allocation4 [shape = 's32[1]{0}', space=sflag, size = 0x4, scoped, tag = 'scoped memory for tpu_custom_call.1']
    #allocation5 [shape = 'u8[32768]{0}', space=vmem, size = 0x8000, scoped, tag = 'input window, operand 1, single buffered']
    #allocation6 [shape = 's32[1]{0}', space=sflag, size = 0x4, scoped, tag = 'scoped memory for tpu_custom_call.1']
    #allocation7 [shape = 'u8[32768]{0}', space=vmem, size = 0x8000, scoped, tag = 'input window, operand 2, single buffered']
    #allocation8 [shape = 'u8[32768]{0}', space=vmem, size = 0x8000, scoped, tag = 'input window, operand 4, single buffered']
    #allocation9 [shape = 's32[1]{0}', space=sflag, size = 0x4, scoped, tag = 'scoped memory for tpu_custom_call.1']
    #allocation10 [shape = 'u8[65536]{0}', space=vmem, size = 0x10000, scoped, tag = 'output window, operand 0, single buffered']
    %11 = vsyncpa [#allocation3], 0
    %12 = vsyncpa [#allocation6], 0
    %13 = vsyncpa [#allocation9], 0
    %14 = vsyncpa [#allocation4], 0
    // Predicated region
    $region2: #{tpu_custom_call.1} parent=1 // pred_check
      _
    $region3: #{tpu_custom_call.1} parent=1 // pred_check_branch
      %16 = sbr.rel (0) target = $region5
    $region4: #{tpu_custom_call.1} parent=1 // pred_region
      %s18 = ssub.s32 1024, 1024
      %19 = vsyncadd [#allocation3], %s18
      %s20 = sshll.u32 [#allocation2], 4
      %s21 = int_to_ptr.vmem [resolvable:$true] %s20
      %26 = dma.hbm_to_vmem [thread:$0]  %s0, 1024, %s21, [#allocation3], 64, 64, 4
    $region5: #{tpu_custom_call.1} parent=1 // pred_fallthru
      _
    // Predicated region
    $region6: #{tpu_custom_call.1} parent=1 // pred_check
      _
    $region7: #{tpu_custom_call.1} parent=1 // pred_check_branch
      %28 = sbr.rel (0) target = $region9
    $region8: #{tpu_custom_call.1} parent=1 // pred_region
      %s30 = ssub.s32 1024, 1024
      %31 = vsyncadd [#allocation6], %s30
      %s32 = sshll.u32 [#allocation5], 4
      %s33 = int_to_ptr.vmem [resolvable:$true] %s32
      %38 = dma.hbm_to_vmem [thread:$0]  %s1, 1024, %s33, [#allocation6], 64, 64, 4
    $region9: #{tpu_custom_call.1} parent=1 // pred_fallthru
      _
    // Predicated region
    $region10: #{tpu_custom_call.1} parent=1 // pred_check
      _
    $region11: #{tpu_custom_call.1} parent=1 // pred_check_branch
      %40 = sbr.rel (0) target = $region13
    $region12: #{tpu_custom_call.1} parent=1 // pred_region
      %s42 = ssub.s32 1024, 1024
      %43 = vsyncadd [#allocation6], %s42
      %s44 = sshll.u32 [#allocation7], 4
      %s45 = int_to_ptr.vmem [resolvable:$true] %s44
      %50 = dma.hbm_to_vmem [thread:$0]  %s2, 1024, %s45, [#allocation6], 64, 64, 4
    $region13: #{tpu_custom_call.1} parent=1 // pred_fallthru
      _
    // Predicated region
    $region14: #{tpu_custom_call.1} parent=1 // pred_check
      _
    $region15: #{tpu_custom_call.1} parent=1 // pred_check_branch
      %52 = sbr.rel (0) target = $region17
    $region16: #{tpu_custom_call.1} parent=1 // pred_region
      _
    $region17: #{tpu_custom_call.1} parent=1 // pred_fallthru
      _
    // Predicated region
    $region18: #{tpu_custom_call.1} parent=1 // pred_check
      _
    $region19: #{tpu_custom_call.1} parent=1 // pred_check_branch
      %54 = sbr.rel (0) target = $region21
    $region20: #{tpu_custom_call.1} parent=1 // pred_region
      %s56 = ssub.s32 1024, 1024
      %57 = vsyncadd [#allocation9], %s56
      %s58 = sshll.u32 [#allocation8], 4
      %s59 = int_to_ptr.vmem [resolvable:$true] %s58
      %64 = dma.hbm_to_vmem [thread:$0]  %s4, 1024, %s59, [#allocation9], 64, 64, 4
    $region21: #{tpu_custom_call.1} parent=1 // pred_fallthru
      _
    // Predicated region
    $region22: #{tpu_custom_call.1} parent=1 // pred_check
      _
    $region23: #{tpu_custom_call.1} parent=1 // pred_check_branch
      %66 = sbr.rel (0) target = $region25
    $region24: #{tpu_custom_call.1} parent=1 // pred_region
      _
    $region25: #{tpu_custom_call.1} parent=1 // pred_fallthru
      _
    // Predicated region
    $region26: #{tpu_custom_call.1} parent=1 // pred_check
      _
    $region27: #{tpu_custom_call.1} parent=1 // pred_check_branch
      %68 = sbr.rel (0) target = $region29
    $region28: #{tpu_custom_call.1} parent=1 // pred_region
      %69 = dma.done [#allocation3], 1024
    $region29: #{tpu_custom_call.1} parent=1 // pred_fallthru
      _
    // Predicated region
    $region30: #{tpu_custom_call.1} parent=1 // pred_check
      _
    $region31: #{tpu_custom_call.1} parent=1 // pred_check_branch
      %71 = sbr.rel (0) target = $region33
    $region32: #{tpu_custom_call.1} parent=1 // pred_region
      %72 = dma.done [#allocation6], 1024
    $region33: #{tpu_custom_call.1} parent=1 // pred_fallthru
      _
    // Predicated region
    $region34: #{tpu_custom_call.1} parent=1 // pred_check
      _
    $region35: #{tpu_custom_call.1} parent=1 // pred_check_branch
      %74 = sbr.rel (0) target = $region37
    $region36: #{tpu_custom_call.1} parent=1 // pred_region
      %75 = dma.done [#allocation6], 1024
    $region37: #{tpu_custom_call.1} parent=1 // pred_fallthru
      _
    // Predicated region
    $region38: #{tpu_custom_call.1} parent=1 // pred_check
      _
    $region39: #{tpu_custom_call.1} parent=1 // pred_check_branch
      %77 = sbr.rel (0) target = $region41
    $region40: #{tpu_custom_call.1} parent=1 // pred_region
      %78 = dma.done [#allocation9], 1024
    $region41: #{tpu_custom_call.1} parent=1 // pred_fallthru
      _
    %v80 = vld [vmem:[#allocation5] sm:$0xf]
    %v81 = vld [vmem:[#allocation5 + $0x4] sm:$0xf]
    %v82 = vld [vmem:[#allocation5 + $0x8] sm:$0xf]
    %v83 = vld [vmem:[#allocation5 + $0xc] sm:$0xf]
    %v84 = vld [vmem:[#allocation5 + $0x10] sm:$0xf]
    %v85 = vld [vmem:[#allocation5 + $0x14] sm:$0xf]
    %v86 = vld [vmem:[#allocation5 + $0x18] sm:$0xf]
    %v87 = vld [vmem:[#allocation5 + $0x1c] sm:$0xf]
    %v88 = vld [vmem:[#allocation5 + $0x20] sm:$0xf]
    %v89 = vld [vmem:[#allocation5 + $0x24] sm:$0xf]
    %v90 = vld [vmem:[#allocation5 + $0x28] sm:$0xf]
    %v91 = vld [vmem:[#allocation5 + $0x2c] sm:$0xf]
    %v92 = vld [vmem:[#allocation5 + $0x30] sm:$0xf]
    %v93 = vld [vmem:[#allocation5 + $0x34] sm:$0xf]
    %v94 = vld [vmem:[#allocation5 + $0x38] sm:$0xf]
    %v95 = vld [vmem:[#allocation5 + $0x3c] sm:$0xf]
    %v96 = vld [vmem:[#allocation7] sm:$0xf]
    %v97 = vld [vmem:[#allocation7 + $0x4] sm:$0xf]
    %v98 = vld [vmem:[#allocation7 + $0x8] sm:$0xf]
    %v99 = vld [vmem:[#allocation7 + $0xc] sm:$0xf]
    %v100 = vld [vmem:[#allocation7 + $0x10] sm:$0xf]
    %v101 = vld [vmem:[#allocation7 + $0x14] sm:$0xf]
    %v102 = vld [vmem:[#allocation7 + $0x18] sm:$0xf]
    %v103 = vld [vmem:[#allocation7 + $0x1c] sm:$0xf]
    %v104 = vld [vmem:[#allocation7 + $0x20] sm:$0xf]
    %v105 = vld [vmem:[#allocation7 + $0x24] sm:$0xf]
    %v106 = vld [vmem:[#allocation7 + $0x28] sm:$0xf]
    %v107 = vld [vmem:[#allocation7 + $0x2c] sm:$0xf]
    %v108 = vld [vmem:[#allocation7 + $0x30] sm:$0xf]
    %v109 = vld [vmem:[#allocation7 + $0x34] sm:$0xf]
    %v110 = vld [vmem:[#allocation7 + $0x38] sm:$0xf]
    %v111 = vld [vmem:[#allocation7 + $0x3c] sm:$0xf]
    %v112 = vld [vmem:[%s3] sm:$0x1]
    %v114 = vlaneseq
    %v115 = vshrl.u32 %v114, 7
    %v116 = vsub.s32 0, %v115
    %v117 = vrot.slane %v112, %v116
    %v135 = vunpack.c.l.b16 %v80
    %v136 = vunpack.c.l.b16 %v81
    %v137 = vunpack.c.l.b16 %v82
    %v138 = vunpack.c.l.b16 %v83
    %v139 = vunpack.c.l.b16 %v84
    %v140 = vunpack.c.l.b16 %v85
    %v141 = vunpack.c.l.b16 %v86
    %v142 = vunpack.c.l.b16 %v87
    %v143 = vunpack.c.l.b16 %v88
    %v144 = vunpack.c.l.b16 %v89
    %v145 = vunpack.c.l.b16 %v90
    %v146 = vunpack.c.l.b16 %v91
    %v147 = vunpack.c.l.b16 %v92
    %v148 = vunpack.c.l.b16 %v93
    %v149 = vunpack.c.l.b16 %v94
    %v150 = vunpack.c.l.b16 %v95
    %v151 = vpack.c.b16 %v136, %v135
    %v152 = vpack.c.b16 %v138, %v137
    %v153 = vpack.c.b16 %v140, %v139
    %v154 = vpack.c.b16 %v142, %v141
    %v155 = vpack.c.b16 %v144, %v143
    %v156 = vpack.c.b16 %v146, %v145
    %v157 = vpack.c.b16 %v148, %v147
    %v158 = vpack.c.b16 %v150, %v149
    %v183 = vunpack.c.l.b16 %v96
    %v184 = vunpack.c.l.b16 %v97
    %v185 = vunpack.c.l.b16 %v98
    %v186 = vunpack.c.l.b16 %v99
    %v187 = vunpack.c.l.b16 %v100
    %v188 = vunpack.c.l.b16 %v101
    %v189 = vunpack.c.l.b16 %v102
    %v190 = vunpack.c.l.b16 %v103
    %v191 = vunpack.c.l.b16 %v104
    %v192 = vunpack.c.l.b16 %v105
    %v193 = vunpack.c.l.b16 %v106
    %v194 = vunpack.c.l.b16 %v107
    %v195 = vunpack.c.l.b16 %v108
    %v196 = vunpack.c.l.b16 %v109
    %v197 = vunpack.c.l.b16 %v110
    %v198 = vunpack.c.l.b16 %v111
    %v199 = vpack.c.b16 %v184, %v183
    %v200 = vpack.c.b16 %v186, %v185
    %v201 = vpack.c.b16 %v188, %v187
    %v202 = vpack.c.b16 %v190, %v189
    %v203 = vpack.c.b16 %v192, %v191
    %v204 = vpack.c.b16 %v194, %v193
    %v205 = vpack.c.b16 %v196, %v195
    %v206 = vpack.c.b16 %v198, %v197
    %215 = vmatprep.subr.bf16.mxu0 0
    %216 = vmatpush1.bf16.msra.mxu0 %v199
    %217 = vmatprep.subr.bf16.mxu0 0
    %218 = vmatpush1.bf16.msra.mxu0 %v200
    %219 = vmatprep.subr.bf16.mxu0 0
    %220 = vmatpush1.bf16.msra.mxu0 %v201
    %221 = vmatprep.subr.bf16.mxu0 0
    %222 = vmatpush1.bf16.msra.mxu0 %v202
    %223 = vmatprep.subr.bf16.mxu0 0
    %224 = vmatpush1.bf16.msra.mxu0 %v203
    %225 = vmatprep.subr.bf16.mxu0 0
    %226 = vmatpush1.bf16.msra.mxu0 %v204
    %227 = vmatprep.subr.bf16.mxu0 0
    %228 = vmatpush1.bf16.msra.mxu0 %v205
    %229 = vmatprep.subr.bf16.mxu0 0
    %230 = vmatpush1.bf16.msra.mxu0 %v206
    %231 = vmatprep.subr.bf16.mxu0 0
    %232 = vmatpush1.bf16.msra.mxu0 0
    %233 = vmatprep.subr.bf16.mxu0 0
    %234 = vmatpush1.bf16.msra.mxu0 0
    %235 = vmatprep.subr.bf16.mxu0 0
    %236 = vmatpush1.bf16.msra.mxu0 0
    %237 = vmatprep.subr.bf16.mxu0 0
    %238 = vmatpush1.bf16.msra.mxu0 0
    %239 = vmatprep.subr.bf16.mxu0 0
    %240 = vmatpush1.bf16.msra.mxu0 0
    %241 = vmatprep.subr.bf16.mxu0 0
    %242 = vmatpush1.bf16.msra.mxu0 0
    %243 = vmatprep.subr.bf16.mxu0 0
    %244 = vmatpush1.bf16.msra.mxu0 0
    %245 = vmatprep.subr.bf16.mxu0 0
    %246 = vmatpush1.bf16.msra.mxu0 0
    %247 = vmatprep.mubr.bf16.mxu0 0
    %248 = vmatmul.mubr.bf16.gmra.mrb[0].mxu0 %v151
    %v249 = vpop.f32.mrb[0].mxu0
    %v250 = vadd.f32 %v117, %v249
    %v251 = vpop.f32.mrb[0].mxu0
    %v252 = vpop.f32.mrb[0].mxu0
    %v253 = vadd.f32 %v117, %v252
    %v254 = vpop.f32.mrb[0].mxu0
    %255 = vmatprep.mubr.bf16.mxu0 0
    %256 = vmatmul.mubr.bf16.gmra.mrb[0].mxu0 %v152
    %v257 = vpop.f32.mrb[0].mxu0
    %v258 = vadd.f32 %v117, %v257
    %v259 = vpop.f32.mrb[0].mxu0
    %v260 = vpop.f32.mrb[0].mxu0
    %v261 = vadd.f32 %v117, %v260
    %v262 = vpop.f32.mrb[0].mxu0
    %263 = vmatprep.mubr.bf16.mxu0 0
    %264 = vmatmul.mubr.bf16.gmra.mrb[0].mxu0 %v153
    %v265 = vpop.f32.mrb[0].mxu0
    %v266 = vadd.f32 %v117, %v265
    %v267 = vpop.f32.mrb[0].mxu0
    %v268 = vpop.f32.mrb[0].mxu0
    %v269 = vadd.f32 %v117, %v268
    %v270 = vpop.f32.mrb[0].mxu0
    %271 = vmatprep.mubr.bf16.mxu0 0
    %272 = vmatmul.mubr.bf16.gmra.mrb[0].mxu0 %v154
    %v273 = vpop.f32.mrb[0].mxu0
    %v274 = vadd.f32 %v117, %v273
    %v275 = vpop.f32.mrb[0].mxu0
    %v276 = vpop.f32.mrb[0].mxu0
    %v277 = vadd.f32 %v117, %v276
    %v278 = vpop.f32.mrb[0].mxu0
    %279 = vmatprep.mubr.bf16.mxu0 0
    %280 = vmatmul.mubr.bf16.gmra.mrb[0].mxu0 %v155
    %v281 = vpop.f32.mrb[0].mxu0
    %v282 = vadd.f32 %v117, %v281
    %v283 = vpop.f32.mrb[0].mxu0
    %v284 = vpop.f32.mrb[0].mxu0
    %v285 = vadd.f32 %v117, %v284
    %v286 = vpop.f32.mrb[0].mxu0
    %287 = vmatprep.mubr.bf16.mxu0 0
    %288 = vmatmul.mubr.bf16.gmra.mrb[0].mxu0 %v156
    %v289 = vpop.f32.mrb[0].mxu0
    %v290 = vadd.f32 %v117, %v289
    %v291 = vpop.f32.mrb[0].mxu0
    %v292 = vpop.f32.mrb[0].mxu0
    %v293 = vadd.f32 %v117, %v292
    %v294 = vpop.f32.mrb[0].mxu0
    %295 = vmatprep.mubr.bf16.mxu0 0
    %296 = vmatmul.mubr.bf16.gmra.mrb[0].mxu0 %v157
    %v297 = vpop.f32.mrb[0].mxu0
    %v298 = vadd.f32 %v117, %v297
    %v299 = vpop.f32.mrb[0].mxu0
    %v300 = vpop.f32.mrb[0].mxu0
    %v301 = vadd.f32 %v117, %v300
    %v302 = vpop.f32.mrb[0].mxu0
    %303 = vmatprep.mubr.bf16.mxu0 0
    %304 = vmatmul.mubr.bf16.gmra.mrb[0].mxu0 %v158
    %v305 = vpop.f32.mrb[0].mxu0
    %v306 = vadd.f32 %v117, %v305
    %v307 = vpop.f32.mrb[0].mxu0
    %v308 = vpop.f32.mrb[0].mxu0
    %v309 = vadd.f32 %v117, %v308
    %v310 = vpop.f32.mrb[0].mxu0
    %311 = vdwg.mxu0
    %v312 = vmax.f32 %v250, 0.0
    %v313 = vmax.f32 %v253, 0.0
    %v314 = vmax.f32 %v258, 0.0
    %v315 = vmax.f32 %v261, 0.0
    %v316 = vmax.f32 %v266, 0.0
    %v317 = vmax.f32 %v269, 0.0
    %v318 = vmax.f32 %v274, 0.0
    %v319 = vmax.f32 %v277, 0.0
    %v320 = vmax.f32 %v282, 0.0
    %v321 = vmax.f32 %v285, 0.0
    %v322 = vmax.f32 %v290, 0.0
    %v323 = vmax.f32 %v293, 0.0
    %v324 = vmax.f32 %v298, 0.0
    %v325 = vmax.f32 %v301, 0.0
    %v326 = vmax.f32 %v306, 0.0
    %v327 = vmax.f32 %v309, 0.0
    %v328 = vpack.c.bf16 %v313, %v312
    %v329 = vpack.c.bf16 %v315, %v314
    %v330 = vpack.c.bf16 %v317, %v316
    %v331 = vpack.c.bf16 %v319, %v318
    %v332 = vpack.c.bf16 %v321, %v320
    %v333 = vpack.c.bf16 %v323, %v322
    %v334 = vpack.c.bf16 %v325, %v324
    %v335 = vpack.c.bf16 %v327, %v326
    %v336 = vld [vmem:[#allocation8] sm:$0xf]
    %v337 = vld [vmem:[#allocation8 + $0x4] sm:$0xf]
    %v338 = vld [vmem:[#allocation8 + $0x8] sm:$0xf]
    %v339 = vld [vmem:[#allocation8 + $0xc] sm:$0xf]
    %v340 = vld [vmem:[#allocation8 + $0x10] sm:$0xf]
    %v341 = vld [vmem:[#allocation8 + $0x14] sm:$0xf]
    %v342 = vld [vmem:[#allocation8 + $0x18] sm:$0xf]
    %v343 = vld [vmem:[#allocation8 + $0x1c] sm:$0xf]
    %v344 = vld [vmem:[#allocation8 + $0x20] sm:$0xf]
    %v345 = vld [vmem:[#allocation8 + $0x24] sm:$0xf]
    %v346 = vld [vmem:[#allocation8 + $0x28] sm:$0xf]
    %v347 = vld [vmem:[#allocation8 + $0x2c] sm:$0xf]
    %v348 = vld [vmem:[#allocation8 + $0x30] sm:$0xf]
    %v349 = vld [vmem:[#allocation8 + $0x34] sm:$0xf]
    %v350 = vld [vmem:[#allocation8 + $0x38] sm:$0xf]
    %v351 = vld [vmem:[#allocation8 + $0x3c] sm:$0xf]
    %v352 = vld [vmem:[%s5] sm:$0x1]
    %v354 = vlaneseq
    %v355 = vshrl.u32 %v354, 7
    %v356 = vsub.s32 0, %v355
    %v357 = vrot.slane %v352, %v356
    %v375 = vunpack.c.l.b16 %v336
    %v376 = vunpack.c.l.b16 %v337
    %v377 = vunpack.c.l.b16 %v338
    %v378 = vunpack.c.l.b16 %v339
    %v379 = vunpack.c.l.b16 %v340
    %v380 = vunpack.c.l.b16 %v341
    %v381 = vunpack.c.l.b16 %v342
    %v382 = vunpack.c.l.b16 %v343
    %v383 = vunpack.c.l.b16 %v344
    %v384 = vunpack.c.l.b16 %v345
    %v385 = vunpack.c.l.b16 %v346
    %v386 = vunpack.c.l.b16 %v347
    %v387 = vunpack.c.l.b16 %v348
    %v388 = vunpack.c.l.b16 %v349
    %v389 = vunpack.c.l.b16 %v350
    %v390 = vunpack.c.l.b16 %v351
    %v391 = vpack.c.b16 %v376, %v375
    %v392 = vpack.c.b16 %v378, %v377
    %v393 = vpack.c.b16 %v380, %v379
    %v394 = vpack.c.b16 %v382, %v381
    %v395 = vpack.c.b16 %v384, %v383
    %v396 = vpack.c.b16 %v386, %v385
    %v397 = vpack.c.b16 %v388, %v387
    %v398 = vpack.c.b16 %v390, %v389
    %407 = vmatprep.subr.bf16.mxu0 0
    %408 = vmatpush1.bf16.msra.mxu0 %v391
    %409 = vmatprep.subr.bf16.mxu0 0
    %410 = vmatpush1.bf16.msra.mxu0 %v392
    %411 = vmatprep.subr.bf16.mxu0 0
    %412 = vmatpush1.bf16.msra.mxu0 %v393
    %413 = vmatprep.subr.bf16.mxu0 0
    %414 = vmatpush1.bf16.msra.mxu0 %v394
    %415 = vmatprep.subr.bf16.mxu0 0
    %416 = vmatpush1.bf16.msra.mxu0 %v395
    %417 = vmatprep.subr.bf16.mxu0 0
    %418 = vmatpush1.bf16.msra.mxu0 %v396
    %419 = vmatprep.subr.bf16.mxu0 0
    %420 = vmatpush1.bf16.msra.mxu0 %v397
    %421 = vmatprep.subr.bf16.mxu0 0
    %422 = vmatpush1.bf16.msra.mxu0 %v398
    %423 = vmatprep.subr.bf16.mxu0 0
    %424 = vmatpush1.bf16.msra.mxu0 0
    %425 = vmatprep.subr.bf16.mxu0 0
    %426 = vmatpush1.bf16.msra.mxu0 0
    %427 = vmatprep.subr.bf16.mxu0 0
    %428 = vmatpush1.bf16.msra.mxu0 0
    %429 = vmatprep.subr.bf16.mxu0 0
    %430 = vmatpush1.bf16.msra.mxu0 0
    %431 = vmatprep.subr.bf16.mxu0 0
    %432 = vmatpush1.bf16.msra.mxu0 0
    %433 = vmatprep.subr.bf16.mxu0 0
    %434 = vmatpush1.bf16.msra.mxu0 0
    %435 = vmatprep.subr.bf16.mxu0 0
    %436 = vmatpush1.bf16.msra.mxu0 0
    %437 = vmatprep.subr.bf16.mxu0 0
    %438 = vmatpush1.bf16.msra.mxu0 0
    %439 = vmatprep.mubr.bf16.mxu0 0
    %440 = vmatmul.mubr.bf16.gmra.mrb[0].mxu0 %v328
    %v441 = vpop.f32.mrb[0].mxu0
    %v442 = vadd.f32 %v357, %v441
    %v443 = vpop.f32.mrb[0].mxu0
    %v444 = vpop.f32.mrb[0].mxu0
    %v445 = vadd.f32 %v357, %v444
    %v446 = vpop.f32.mrb[0].mxu0
    %447 = vmatprep.mubr.bf16.mxu0 0
    %448 = vmatmul.mubr.bf16.gmra.mrb[0].mxu0 %v329
    %v449 = vpop.f32.mrb[0].mxu0
    %v450 = vadd.f32 %v357, %v449
    %v451 = vpop.f32.mrb[0].mxu0
    %v452 = vpop.f32.mrb[0].mxu0
    %v453 = vadd.f32 %v357, %v452
    %v454 = vpop.f32.mrb[0].mxu0
    %455 = vmatprep.mubr.bf16.mxu0 0
    %456 = vmatmul.mubr.bf16.gmra.mrb[0].mxu0 %v330
    %v457 = vpop.f32.mrb[0].mxu0
    %v458 = vadd.f32 %v357, %v457
    %v459 = vpop.f32.mrb[0].mxu0
    %v460 = vpop.f32.mrb[0].mxu0
    %v461 = vadd.f32 %v357, %v460
    %v462 = vpop.f32.mrb[0].mxu0
    %463 = vmatprep.mubr.bf16.mxu0 0
    %464 = vmatmul.mubr.bf16.gmra.mrb[0].mxu0 %v331
    %v465 = vpop.f32.mrb[0].mxu0
    %v466 = vadd.f32 %v357, %v465
    %v467 = vpop.f32.mrb[0].mxu0
    %v468 = vpop.f32.mrb[0].mxu0
    %v469 = vadd.f32 %v357, %v468
    %v470 = vpop.f32.mrb[0].mxu0
    %471 = vmatprep.mubr.bf16.mxu0 0
    %472 = vmatmul.mubr.bf16.gmra.mrb[0].mxu0 %v332
    %v473 = vpop.f32.mrb[0].mxu0
    %v474 = vadd.f32 %v357, %v473
    %v475 = vpop.f32.mrb[0].mxu0
    %v476 = vpop.f32.mrb[0].mxu0
    %v477 = vadd.f32 %v357, %v476
    %v478 = vpop.f32.mrb[0].mxu0
    %479 = vmatprep.mubr.bf16.mxu0 0
    %480 = vmatmul.mubr.bf16.gmra.mrb[0].mxu0 %v333
    %v481 = vpop.f32.mrb[0].mxu0
    %v482 = vadd.f32 %v357, %v481
    %v483 = vpop.f32.mrb[0].mxu0
    %v484 = vpop.f32.mrb[0].mxu0
    %v485 = vadd.f32 %v357, %v484
    %v486 = vpop.f32.mrb[0].mxu0
    %487 = vmatprep.mubr.bf16.mxu0 0
    %488 = vmatmul.mubr.bf16.gmra.mrb[0].mxu0 %v334
    %v489 = vpop.f32.mrb[0].mxu0
    %v490 = vadd.f32 %v357, %v489
    %v491 = vpop.f32.mrb[0].mxu0
    %v492 = vpop.f32.mrb[0].mxu0
    %v493 = vadd.f32 %v357, %v492
    %v494 = vpop.f32.mrb[0].mxu0
    %495 = vmatprep.mubr.bf16.mxu0 0
    %496 = vmatmul.mubr.bf16.gmra.mrb[0].mxu0 %v335
    %v497 = vpop.f32.mrb[0].mxu0
    %v498 = vadd.f32 %v357, %v497
    %v499 = vpop.f32.mrb[0].mxu0
    %v500 = vpop.f32.mrb[0].mxu0
    %v501 = vadd.f32 %v357, %v500
    %v502 = vpop.f32.mrb[0].mxu0
    %503 = vdwg.mxu0
    %v504 = vld [vmem:[#allocation2] sm:$0xf]
    %v505 = vld [vmem:[#allocation2 + $0x4] sm:$0xf]
    %v506 = vld [vmem:[#allocation2 + $0x8] sm:$0xf]
    %v507 = vld [vmem:[#allocation2 + $0xc] sm:$0xf]
    %v508 = vld [vmem:[#allocation2 + $0x10] sm:$0xf]
    %v509 = vld [vmem:[#allocation2 + $0x14] sm:$0xf]
    %v510 = vld [vmem:[#allocation2 + $0x18] sm:$0xf]
    %v511 = vld [vmem:[#allocation2 + $0x1c] sm:$0xf]
    %v512 = vld [vmem:[#allocation2 + $0x20] sm:$0xf]
    %v513 = vld [vmem:[#allocation2 + $0x24] sm:$0xf]
    %v514 = vld [vmem:[#allocation2 + $0x28] sm:$0xf]
    %v515 = vld [vmem:[#allocation2 + $0x2c] sm:$0xf]
    %v516 = vld [vmem:[#allocation2 + $0x30] sm:$0xf]
    %v517 = vld [vmem:[#allocation2 + $0x34] sm:$0xf]
    %v518 = vld [vmem:[#allocation2 + $0x38] sm:$0xf]
    %v519 = vld [vmem:[#allocation2 + $0x3c] sm:$0xf]
    %v520 = vmul.f32 %v442, 0.1
    %v521 = vmul.f32 %v445, 0.1
    %v522 = vmul.f32 %v450, 0.1
    %v523 = vmul.f32 %v453, 0.1
    %v524 = vmul.f32 %v458, 0.1
    %v525 = vmul.f32 %v461, 0.1
    %v526 = vmul.f32 %v466, 0.1
    %v527 = vmul.f32 %v469, 0.1
    %v528 = vmul.f32 %v474, 0.1
    %v529 = vmul.f32 %v477, 0.1
    %v530 = vmul.f32 %v482, 0.1
    %v531 = vmul.f32 %v485, 0.1
    %v532 = vmul.f32 %v490, 0.1
    %v533 = vmul.f32 %v493, 0.1
    %v534 = vmul.f32 %v498, 0.1
    %v535 = vmul.f32 %v501, 0.1
    %v536 = vpack.c.bf16 %v445, %v442
    %v537 = vpack.c.bf16 %v453, %v450
    %v538 = vpack.c.bf16 %v461, %v458
    %v539 = vpack.c.bf16 %v469, %v466
    %v540 = vpack.c.bf16 %v477, %v474
    %v541 = vpack.c.bf16 %v485, %v482
    %v542 = vpack.c.bf16 %v493, %v490
    %v543 = vpack.c.bf16 %v501, %v498
    %v560 = vunpack.c.l.b16 %v504
    %v561 = vunpack.c.l.b16 %v505
    %v562 = vunpack.c.l.b16 %v506
    %v563 = vunpack.c.l.b16 %v507
    %v564 = vunpack.c.l.b16 %v508
    %v565 = vunpack.c.l.b16 %v509
    %v566 = vunpack.c.l.b16 %v510
    %v567 = vunpack.c.l.b16 %v511
    %v568 = vunpack.c.l.b16 %v512
    %v569 = vunpack.c.l.b16 %v513
    %v570 = vunpack.c.l.b16 %v514
    %v571 = vunpack.c.l.b16 %v515
    %v572 = vunpack.c.l.b16 %v516
    %v573 = vunpack.c.l.b16 %v517
    %v574 = vunpack.c.l.b16 %v518
    %v575 = vunpack.c.l.b16 %v519
    %v576 = vpack.c.b16 %v561, %v560
    %v577 = vpack.c.b16 %v563, %v562
    %v578 = vpack.c.b16 %v565, %v564
    %v579 = vpack.c.b16 %v567, %v566
    %v580 = vpack.c.b16 %v569, %v568
    %v581 = vpack.c.b16 %v571, %v570
    %v582 = vpack.c.b16 %v573, %v572
    %v583 = vpack.c.b16 %v575, %v574
    %592 = vmatprep.subr.bf16.mxu0 0
    %593 = vmatpush1.bf16.msra.mxu0 %v536
    %594 = vmatprep.subr.bf16.mxu0 0
    %595 = vmatpush1.bf16.msra.mxu0 %v537
    %596 = vmatprep.subr.bf16.mxu0 0
    %597 = vmatpush1.bf16.msra.mxu0 %v538
    %598 = vmatprep.subr.bf16.mxu0 0
    %599 = vmatpush1.bf16.msra.mxu0 %v539
    %600 = vmatprep.subr.bf16.mxu0 0
    %601 = vmatpush1.bf16.msra.mxu0 %v540
    %602 = vmatprep.subr.bf16.mxu0 0
    %603 = vmatpush1.bf16.msra.mxu0 %v541
    %604 = vmatprep.subr.bf16.mxu0 0
    %605 = vmatpush1.bf16.msra.mxu0 %v542
    %606 = vmatprep.subr.bf16.mxu0 0
    %607 = vmatpush1.bf16.msra.mxu0 %v543
    %608 = vmatprep.subr.bf16.mxu0 0
    %609 = vmatpush1.bf16.msra.mxu0 0
    %610 = vmatprep.subr.bf16.mxu0 0
    %611 = vmatpush1.bf16.msra.mxu0 0
    %612 = vmatprep.subr.bf16.mxu0 0
    %613 = vmatpush1.bf16.msra.mxu0 0
    %614 = vmatprep.subr.bf16.mxu0 0
    %615 = vmatpush1.bf16.msra.mxu0 0
    %616 = vmatprep.subr.bf16.mxu0 0
    %617 = vmatpush1.bf16.msra.mxu0 0
    %618 = vmatprep.subr.bf16.mxu0 0
    %619 = vmatpush1.bf16.msra.mxu0 0
    %620 = vmatprep.subr.bf16.mxu0 0
    %621 = vmatpush1.bf16.msra.mxu0 0
    %622 = vmatprep.subr.bf16.mxu0 0
    %623 = vmatpush1.bf16.msra.mxu0 0
    %624 = vmatprep.mubr.bf16.mxu0 0
    %625 = vmatmul.mubr.bf16.gmra.mrb[0].mxu0 %v576
    %v626 = vpop.f32.mrb[0].mxu0
    %v627 = vadd.f32 %v520, %v626
    %v628 = vpop.f32.mrb[0].mxu0
    %v629 = vpop.f32.mrb[0].mxu0
    %v630 = vadd.f32 %v521, %v629
    %v631 = vpop.f32.mrb[0].mxu0
    %632 = vmatprep.mubr.bf16.mxu0 0
    %633 = vmatmul.mubr.bf16.gmra.mrb[0].mxu0 %v577
    %v634 = vpop.f32.mrb[0].mxu0
    %v635 = vadd.f32 %v522, %v634
    %v636 = vpop.f32.mrb[0].mxu0
    %v637 = vpop.f32.mrb[0].mxu0
    %v638 = vadd.f32 %v523, %v637
    %v639 = vpop.f32.mrb[0].mxu0
    %640 = vmatprep.mubr.bf16.mxu0 0
    %641 = vmatmul.mubr.bf16.gmra.mrb[0].mxu0 %v578
    %v642 = vpop.f32.mrb[0].mxu0
    %v643 = vadd.f32 %v524, %v642
    %v644 = vpop.f32.mrb[0].mxu0
    %v645 = vpop.f32.mrb[0].mxu0
    %v646 = vadd.f32 %v525, %v645
    %v647 = vpop.f32.mrb[0].mxu0
    %648 = vmatprep.mubr.bf16.mxu0 0
    %649 = vmatmul.mubr.bf16.gmra.mrb[0].mxu0 %v579
    %v650 = vpop.f32.mrb[0].mxu0
    %v651 = vadd.f32 %v526, %v650
    %v652 = vpop.f32.mrb[0].mxu0
    %v653 = vpop.f32.mrb[0].mxu0
    %v654 = vadd.f32 %v527, %v653
    %v655 = vpop.f32.mrb[0].mxu0
    %656 = vmatprep.mubr.bf16.mxu0 0
    %657 = vmatmul.mubr.bf16.gmra.mrb[0].mxu0 %v580
    %v658 = vpop.f32.mrb[0].mxu0
    %v659 = vadd.f32 %v528, %v658
    %v660 = vpop.f32.mrb[0].mxu0
    %v661 = vpop.f32.mrb[0].mxu0
    %v662 = vadd.f32 %v529, %v661
    %v663 = vpop.f32.mrb[0].mxu0
    %664 = vmatprep.mubr.bf16.mxu0 0
    %665 = vmatmul.mubr.bf16.gmra.mrb[0].mxu0 %v581
    %v666 = vpop.f32.mrb[0].mxu0
    %v667 = vadd.f32 %v530, %v666
    %v668 = vpop.f32.mrb[0].mxu0
    %v669 = vpop.f32.mrb[0].mxu0
    %v670 = vadd.f32 %v531, %v669
    %v671 = vpop.f32.mrb[0].mxu0
    %672 = vmatprep.mubr.bf16.mxu0 0
    %673 = vmatmul.mubr.bf16.gmra.mrb[0].mxu0 %v582
    %v674 = vpop.f32.mrb[0].mxu0
    %v675 = vadd.f32 %v532, %v674
    %v676 = vpop.f32.mrb[0].mxu0
    %v677 = vpop.f32.mrb[0].mxu0
    %v678 = vadd.f32 %v533, %v677
    %v679 = vpop.f32.mrb[0].mxu0
    %680 = vmatprep.mubr.bf16.mxu0 0
    %681 = vmatmul.mubr.bf16.gmra.mrb[0].mxu0 %v583
    %v682 = vpop.f32.mrb[0].mxu0
    %v683 = vadd.f32 %v534, %v682
    %v684 = vpop.f32.mrb[0].mxu0
    %v685 = vpop.f32.mrb[0].mxu0
    %v686 = vadd.f32 %v535, %v685
    %v687 = vpop.f32.mrb[0].mxu0
    %688 = vdwg.mxu0
    %v689 = vpack.c.bf16 %v630, %v627
    %v690 = vpack.c.bf16 %v638, %v635
    %v691 = vpack.c.bf16 %v646, %v643
    %v692 = vpack.c.bf16 %v654, %v651
    %v693 = vpack.c.bf16 %v662, %v659
    %v694 = vpack.c.bf16 %v670, %v667
    %v695 = vpack.c.bf16 %v678, %v675
    %v696 = vpack.c.bf16 %v686, %v683
    %697 = vmatprep.subr.bf16.mxu0 0
    %698 = vmatpush1.bf16.msra.mxu0 %v689
    %699 = vmatprep.subr.bf16.mxu0 0
    %700 = vmatpush1.bf16.msra.mxu0 %v690
    %701 = vmatprep.subr.bf16.mxu0 0
    %702 = vmatpush1.bf16.msra.mxu0 %v691
    %703 = vmatprep.subr.bf16.mxu0 0
    %704 = vmatpush1.bf16.msra.mxu0 %v692
    %705 = vmatprep.subr.bf16.mxu0 0
    %706 = vmatpush1.bf16.msra.mxu0 %v693
    %707 = vmatprep.subr.bf16.mxu0 0
    %708 = vmatpush1.bf16.msra.mxu0 %v694
    %709 = vmatprep.subr.bf16.mxu0 0
    %710 = vmatpush1.bf16.msra.mxu0 %v695
    %711 = vmatprep.subr.bf16.mxu0 0
    %712 = vmatpush1.bf16.msra.mxu0 %v696
    %713 = vmatprep.subr.bf16.mxu0 0
    %714 = vmatpush1.bf16.msra.mxu0 0
    %715 = vmatprep.subr.bf16.mxu0 0
    %716 = vmatpush1.bf16.msra.mxu0 0
    %717 = vmatprep.subr.bf16.mxu0 0
    %718 = vmatpush1.bf16.msra.mxu0 0
    %719 = vmatprep.subr.bf16.mxu0 0
    %720 = vmatpush1.bf16.msra.mxu0 0
    %721 = vmatprep.subr.bf16.mxu0 0
    %722 = vmatpush1.bf16.msra.mxu0 0
    %723 = vmatprep.subr.bf16.mxu0 0
    %724 = vmatpush1.bf16.msra.mxu0 0
    %725 = vmatprep.subr.bf16.mxu0 0
    %726 = vmatpush1.bf16.msra.mxu0 0
    %727 = vmatprep.subr.bf16.mxu0 0
    %728 = vmatpush1.bf16.msra.mxu0 0
    %729 = vmatprep.mubr.bf16.mxu0 0
    %730 = vmatmul.mubr.bf16.gmra.mrb[0].mxu0 %v576
    %v731 = vpop.f32.mrb[0].mxu0
    %v732 = vadd.f32 %v520, %v731
    %v733 = vpop.f32.mrb[0].mxu0
    %v734 = vpop.f32.mrb[0].mxu0
    %v735 = vadd.f32 %v521, %v734
    %v736 = vpop.f32.mrb[0].mxu0
    %737 = vmatprep.mubr.bf16.mxu0 0
    %738 = vmatmul.mubr.bf16.gmra.mrb[0].mxu0 %v577
    %v739 = vpop.f32.mrb[0].mxu0
    %v740 = vadd.f32 %v522, %v739
    %v741 = vpop.f32.mrb[0].mxu0
    %v742 = vpop.f32.mrb[0].mxu0
    %v743 = vadd.f32 %v523, %v742
    %v744 = vpop.f32.mrb[0].mxu0
    %745 = vmatprep.mubr.bf16.mxu0 0
    %746 = vmatmul.mubr.bf16.gmra.mrb[0].mxu0 %v578
    %v747 = vpop.f32.mrb[0].mxu0
    %v748 = vadd.f32 %v524, %v747
    %v749 = vpop.f32.mrb[0].mxu0
    %v750 = vpop.f32.mrb[0].mxu0
    %v751 = vadd.f32 %v525, %v750
    %v752 = vpop.f32.mrb[0].mxu0
    %753 = vmatprep.mubr.bf16.mxu0 0
    %754 = vmatmul.mubr.bf16.gmra.mrb[0].mxu0 %v579
    %v755 = vpop.f32.mrb[0].mxu0
    %v756 = vadd.f32 %v526, %v755
    %v757 = vpop.f32.mrb[0].mxu0
    %v758 = vpop.f32.mrb[0].mxu0
    %v759 = vadd.f32 %v527, %v758
    %v760 = vpop.f32.mrb[0].mxu0
    %761 = vmatprep.mubr.bf16.mxu0 0
    %762 = vmatmul.mubr.bf16.gmra.mrb[0].mxu0 %v580
    %v763 = vpop.f32.mrb[0].mxu0
    %v764 = vadd.f32 %v528, %v763
    %v765 = vpop.f32.mrb[0].mxu0
    %v766 = vpop.f32.mrb[0].mxu0
    %v767 = vadd.f32 %v529, %v766
    %v768 = vpop.f32.mrb[0].mxu0
    %769 = vmatprep.mubr.bf16.mxu0 0
    %770 = vmatmul.mubr.bf16.gmra.mrb[0].mxu0 %v581
    %v771 = vpop.f32.mrb[0].mxu0
    %v772 = vadd.f32 %v530, %v771
    %v773 = vpop.f32.mrb[0].mxu0
    %v774 = vpop.f32.mrb[0].mxu0
    %v775 = vadd.f32 %v531, %v774
    %v776 = vpop.f32.mrb[0].mxu0
    %777 = vmatprep.mubr.bf16.mxu0 0
    %778 = vmatmul.mubr.bf16.gmra.mrb[0].mxu0 %v582
    %v779 = vpop.f32.mrb[0].mxu0
    %v780 = vadd.f32 %v532, %v779
    %v781 = vpop.f32.mrb[0].mxu0
    %v782 = vpop.f32.mrb[0].mxu0
    %v783 = vadd.f32 %v533, %v782
    %v784 = vpop.f32.mrb[0].mxu0
    %785 = vmatprep.mubr.bf16.mxu0 0
    %786 = vmatmul.mubr.bf16.gmra.mrb[0].mxu0 %v583
    %v787 = vpop.f32.mrb[0].mxu0
    %v788 = vadd.f32 %v534, %v787
    %v789 = vpop.f32.mrb[0].mxu0
    %v790 = vpop.f32.mrb[0].mxu0
    %v791 = vadd.f32 %v535, %v790
    %v792 = vpop.f32.mrb[0].mxu0
    %793 = vdwg.mxu0
    %v794 = vpack.c.bf16 %v735, %v732
    %v795 = vpack.c.bf16 %v743, %v740
    %v796 = vpack.c.bf16 %v751, %v748
    %v797 = vpack.c.bf16 %v759, %v756
    %v798 = vpack.c.bf16 %v767, %v764
    %v799 = vpack.c.bf16 %v775, %v772
    %v800 = vpack.c.bf16 %v783, %v780
    %v801 = vpack.c.bf16 %v791, %v788
    %802 = vmatprep.subr.bf16.mxu0 0
    %803 = vmatpush1.bf16.msra.mxu0 %v794
    %804 = vmatprep.subr.bf16.mxu0 0
    %805 = vmatpush1.bf16.msra.mxu0 %v795
    %806 = vmatprep.subr.bf16.mxu0 0
    %807 = vmatpush1.bf16.msra.mxu0 %v796
    %808 = vmatprep.subr.bf16.mxu0 0
    %809 = vmatpush1.bf16.msra.mxu0 %v797
    %810 = vmatprep.subr.bf16.mxu0 0
    %811 = vmatpush1.bf16.msra.mxu0 %v798
    %812 = vmatprep.subr.bf16.mxu0 0
    %813 = vmatpush1.bf16.msra.mxu0 %v799
    %814 = vmatprep.subr.bf16.mxu0 0
    %815 = vmatpush1.bf16.msra.mxu0 %v800
    %816 = vmatprep.subr.bf16.mxu0 0
    %817 = vmatpush1.bf16.msra.mxu0 %v801
    %818 = vmatprep.subr.bf16.mxu0 0
    %819 = vmatpush1.bf16.msra.mxu0 0
    %820 = vmatprep.subr.bf16.mxu0 0
    %821 = vmatpush1.bf16.msra.mxu0 0
    %822 = vmatprep.subr.bf16.mxu0 0
    %823 = vmatpush1.bf16.msra.mxu0 0
    %824 = vmatprep.subr.bf16.mxu0 0
    %825 = vmatpush1.bf16.msra.mxu0 0
    %826 = vmatprep.subr.bf16.mxu0 0
    %827 = vmatpush1.bf16.msra.mxu0 0
    %828 = vmatprep.subr.bf16.mxu0 0
    %829 = vmatpush1.bf16.msra.mxu0 0
    %830 = vmatprep.subr.bf16.mxu0 0
    %831 = vmatpush1.bf16.msra.mxu0 0
    %832 = vmatprep.subr.bf16.mxu0 0
    %833 = vmatpush1.bf16.msra.mxu0 0
    %834 = vmatprep.mubr.bf16.mxu0 0
    %835 = vmatmul.mubr.bf16.gmra.mrb[0].mxu0 %v576
    %v836 = vpop.f32.mrb[0].mxu0
    %v837 = vadd.f32 %v520, %v836
    %v838 = vpop.f32.mrb[0].mxu0
    %v839 = vpop.f32.mrb[0].mxu0
    %v840 = vadd.f32 %v521, %v839
    %v841 = vpop.f32.mrb[0].mxu0
    %842 = vmatprep.mubr.bf16.mxu0 0
    %843 = vmatmul.mubr.bf16.gmra.mrb[0].mxu0 %v577
    %v844 = vpop.f32.mrb[0].mxu0
    %v845 = vadd.f32 %v522, %v844
    %v846 = vpop.f32.mrb[0].mxu0
    %v847 = vpop.f32.mrb[0].mxu0
    %v848 = vadd.f32 %v523, %v847
    %v849 = vpop.f32.mrb[0].mxu0
    %850 = vmatprep.mubr.bf16.mxu0 0
    %851 = vmatmul.mubr.bf16.gmra.mrb[0].mxu0 %v578
    %v852 = vpop.f32.mrb[0].mxu0
    %v853 = vadd.f32 %v524, %v852
    %v854 = vpop.f32.mrb[0].mxu0
    %v855 = vpop.f32.mrb[0].mxu0
    %v856 = vadd.f32 %v525, %v855
    %v857 = vpop.f32.mrb[0].mxu0
    %858 = vmatprep.mubr.bf16.mxu0 0
    %859 = vmatmul.mubr.bf16.gmra.mrb[0].mxu0 %v579
    %v860 = vpop.f32.mrb[0].mxu0
    %v861 = vadd.f32 %v526, %v860
    %v862 = vpop.f32.mrb[0].mxu0
    %v863 = vpop.f32.mrb[0].mxu0
    %v864 = vadd.f32 %v527, %v863
    %v865 = vpop.f32.mrb[0].mxu0
    %866 = vmatprep.mubr.bf16.mxu0 0
    %867 = vmatmul.mubr.bf16.gmra.mrb[0].mxu0 %v580
    %v868 = vpop.f32.mrb[0].mxu0
    %v869 = vadd.f32 %v528, %v868
    %v870 = vpop.f32.mrb[0].mxu0
    %v871 = vpop.f32.mrb[0].mxu0
    %v872 = vadd.f32 %v529, %v871
    %v873 = vpop.f32.mrb[0].mxu0
    %874 = vmatprep.mubr.bf16.mxu0 0
    %875 = vmatmul.mubr.bf16.gmra.mrb[0].mxu0 %v581
    %v876 = vpop.f32.mrb[0].mxu0
    %v877 = vadd.f32 %v530, %v876
    %v878 = vpop.f32.mrb[0].mxu0
    %v879 = vpop.f32.mrb[0].mxu0
    %v880 = vadd.f32 %v531, %v879
    %v881 = vpop.f32.mrb[0].mxu0
    %882 = vmatprep.mubr.bf16.mxu0 0
    %883 = vmatmul.mubr.bf16.gmra.mrb[0].mxu0 %v582
    %v884 = vpop.f32.mrb[0].mxu0
    %v885 = vadd.f32 %v532, %v884
    %v886 = vpop.f32.mrb[0].mxu0
    %v887 = vpop.f32.mrb[0].mxu0
    %v888 = vadd.f32 %v533, %v887
    %v889 = vpop.f32.mrb[0].mxu0
    %890 = vmatprep.mubr.bf16.mxu0 0
    %891 = vmatmul.mubr.bf16.gmra.mrb[0].mxu0 %v583
    %v892 = vpop.f32.mrb[0].mxu0
    %v893 = vadd.f32 %v534, %v892
    %v894 = vpop.f32.mrb[0].mxu0
    %v895 = vpop.f32.mrb[0].mxu0
    %v896 = vadd.f32 %v535, %v895
    %v897 = vpop.f32.mrb[0].mxu0
    %898 = vdwg.mxu0
    %899 = vst [vmem:[#allocation10] sm:$0xff] %v837
    %900 = vst [vmem:[#allocation10 + $0x8] sm:$0xff] %v840
    %901 = vst [vmem:[#allocation10 + $0x10] sm:$0xff] %v845
    %902 = vst [vmem:[#allocation10 + $0x18] sm:$0xff] %v848
    %903 = vst [vmem:[#allocation10 + $0x20] sm:$0xff] %v853
    %904 = vst [vmem:[#allocation10 + $0x28] sm:$0xff] %v856
    %905 = vst [vmem:[#allocation10 + $0x30] sm:$0xff] %v861
    %906 = vst [vmem:[#allocation10 + $0x38] sm:$0xff] %v864
    %907 = vst [vmem:[#allocation10 + $0x40] sm:$0xff] %v869
    %908 = vst [vmem:[#allocation10 + $0x48] sm:$0xff] %v872
    %909 = vst [vmem:[#allocation10 + $0x50] sm:$0xff] %v877
    %910 = vst [vmem:[#allocation10 + $0x58] sm:$0xff] %v880
    %911 = vst [vmem:[#allocation10 + $0x60] sm:$0xff] %v885
    %912 = vst [vmem:[#allocation10 + $0x68] sm:$0xff] %v888
    %913 = vst [vmem:[#allocation10 + $0x70] sm:$0xff] %v893
    %914 = vst [vmem:[#allocation10 + $0x78] sm:$0xff] %v896
    // Predicated region
    $region42: #{tpu_custom_call.1} parent=1 // pred_check
      _
    $region43: #{tpu_custom_call.1} parent=1 // pred_check_branch
      %916 = sbr.rel (0) target = $region45
    $region44: #{tpu_custom_call.1} parent=1 // pred_region
      %s918 = ssub.s32 2048, 2048
      %919 = vsyncadd [#allocation4], %s918
      %s920 = sshll.u32 [#allocation10], 4
      %s921 = int_to_ptr.vmem [resolvable:$true] %s920
      %926 = dma.vmem_to_hbm [thread:$0]  %s921, 2048, %s6, [#allocation4], 128, 128, 8
    $region45: #{tpu_custom_call.1} parent=1 // pred_fallthru
      _
    // Predicated region
    $region46: #{tpu_custom_call.1} parent=1 // pred_check
      _
    $region47: #{tpu_custom_call.1} parent=1 // pred_check_branch
      %928 = sbr.rel (0) target = $region49
    $region48: #{tpu_custom_call.1} parent=1 // pred_region
      %929 = dma.done [#allocation4], 2048
    $region49: #{tpu_custom_call.1} parent=1 // pred_fallthru
      _
    %930 = vsyncpa [#allocation3], 1
    %931 = vsyncpa [#allocation6], 1
    %932 = vsyncpa [#allocation9], 1
    %933 = vsyncpa [#allocation4], 1

</llo_original>
